<compile_context>
chip_gen: v6e
topology: v6e:2x2x1
jax: 0.10.0
libtpu: 0.0.40
codegen_flags: <defaults>
</compile_context>

<pallas_src>
import jax
import jax.numpy as jnp
from jax.experimental import pallas as pl
from jax.experimental.pallas import tpu as pltpu

# ----------------------------- configuration --------------------------------
B, CIN, H, W = 2, 3, 16, 16          # images: (B, 3, H, W)  (NCHW, like PyTorch)
KH, KW = 3, 3                        # backbone stand-in 3x3 conv
C_FEAT = 64                          # stand-in for resnet.fc.in_features (=2048)
EMBED = 32                           # embed_size of the 1x1 conv head
HW = H * W
KK = KH * KW * CIN


# ------------------------------ Pallas kernel --------------------------------
def encoder_kernel(xcolT_ref, w1T_ref, b1_ref, w2T_ref, b2_ref, out_ref):
    """Fused backbone-conv (im2col matmul) + ReLU + 1x1-conv head, one image.

    Everything is channel-major (lane dim = H*W), so no in-kernel transpose.

    xcolT_ref: (KK, H*W)        bf16  im2col patch-dim-major columns
    w1T_ref:   (C_FEAT, KK)     bf16  backbone conv weights, transposed
    b1_ref:    (C_FEAT, 1)      f32
    w2T_ref:   (EMBED, C_FEAT)  bf16  1x1 conv weights, transposed
    b2_ref:    (EMBED, 1)       f32
    out_ref:   (EMBED, H*W)     f32   == features.view(B, C, -1)[b]
    """
    # Backbone stand-in conv as matmul (bf16 MXU, f32 accumulation).
    h = jnp.dot(w1T_ref[...], xcolT_ref[...],
                preferred_element_type=jnp.float32)          # (C_FEAT, HW)
    h = jnp.maximum(h + b1_ref[...], 0.0)                    # bias + ReLU
    # 1x1 Conv2d(resnet.fc.in_features -> embed_size): channel matmul + bias.
    y = jnp.dot(w2T_ref[...], h.astype(jnp.bfloat16),
                preferred_element_type=jnp.float32)          # (EMBED, HW)
    # Dropout2d: eval-mode identity (see TODO above).
    out_ref[...] = (y + b2_ref[...]).astype(out_ref.dtype)


# ------------------------------ Python wrapper --------------------------------
def encoder_cnn_forward(images_nchw, params):
    """images_nchw: (B, CIN, H, W) float32  ->  features: (B, EMBED, H*W)."""
    w1, b1, w2, b2 = params           # (KK,C_FEAT), (C_FEAT,), (C_FEAT,EMBED), (EMBED,)
    Bs, Ci, Hs, Ws = images_nchw.shape
    hw = Hs * Ws
    kk = KH * KW * Ci

    # --- glue: NCHW -> NHWC, 'same' pad, im2col (pure reshuffling, no math) ---
    x_nhwc = jnp.transpose(images_nchw, (0, 2, 3, 1))                 # (B,H,W,Cin)
    xp = jnp.pad(x_nhwc, ((0, 0), (1, 1), (1, 1), (0, 0)))            # (B,H+2,W+2,Cin)
    cols = jnp.concatenate(
        [xp[:, dy:dy + Hs, dx:dx + Ws, :] for dy in range(KH) for dx in range(KW)],
        axis=-1,
    )                                                                 # (B,H,W,9*Cin)
    # Patch-dim-major columns so the kernel is channel-major end-to-end.
    x_colT = jnp.swapaxes(cols.reshape(Bs, hw, kk), 1, 2).astype(jnp.bfloat16)  # (B,KK,HW)

    w1T = jnp.swapaxes(w1, 0, 1).astype(jnp.bfloat16)                 # (C_FEAT, KK)
    w2T = jnp.swapaxes(w2, 0, 1).astype(jnp.bfloat16)                 # (EMBED, C_FEAT)
    b1c = b1.reshape(C_FEAT, 1).astype(jnp.float32)
    b2c = b2.reshape(EMBED, 1).astype(jnp.float32)

    out = pl.pallas_call(
        encoder_kernel,
        out_shape=jax.ShapeDtypeStruct((Bs, EMBED, hw), jnp.float32),
        grid_spec=pltpu.PrefetchScalarGridSpec(
            num_scalar_prefetch=0,
            grid=(Bs,),                                    # one step per image
            in_specs=[
                pl.BlockSpec((None, kk, hw), lambda b: (b, 0, 0)),     # per-image cols
                pl.BlockSpec((C_FEAT, kk), lambda b: (0, 0)),          # weights: resident
                pl.BlockSpec((C_FEAT, 1), lambda b: (0, 0)),
                pl.BlockSpec((EMBED, C_FEAT), lambda b: (0, 0)),
                pl.BlockSpec((EMBED, 1), lambda b: (0, 0)),
            ],
            # Channel-major per-image output block: (EMBED, H*W) = (32, 256).
            out_specs=pl.BlockSpec((None, EMBED, hw), lambda b: (b, 0, 0)),
        ),
        compiler_params=pltpu.CompilerParams(
            dimension_semantics=("parallel",),             # batch-parallel (2 TCs on v7x)
        ),
    )(x_colT, w1T, b1c, w2T, b2c)

    # Already (B, EMBED, H*W) == features.view(B, C, -1): no wrapper transpose.
    return out


# ------------------------------ reference (plain JAX, f32) --------------------
def encoder_cnn_reference(images_nchw, params):
    w1, b1, w2, b2 = params
    Bs, Ci, Hs, Ws = images_nchw.shape
    x_nhwc = jnp.transpose(images_nchw, (0, 2, 3, 1))
    xp = jnp.pad(x_nhwc, ((0, 0), (1, 1), (1, 1), (0, 0)))
    cols = jnp.concatenate(
        [xp[:, dy:dy + Hs, dx:dx + Ws, :] for dy in range(KH) for dx in range(KW)],
        axis=-1,
    ).reshape(Bs * Hs * Ws, KH * KW * Ci)
    h = jnp.maximum(cols @ w1 + b1, 0.0)
    y = h @ w2 + b2
    feats = y.reshape(Bs, Hs, Ws, EMBED).transpose(0, 3, 1, 2)
    return feats.reshape(Bs, EMBED, Hs * Ws)


# ------------------------------ main ------------------------------------------
if __name__ == "__main__":
    key = jax.random.PRNGKey(0)
    k_img, k_w1, k_b1, k_w2, k_b2 = jax.random.split(key, 5)

    images = jax.random.normal(k_img, (B, CIN, H, W), dtype=jnp.float32)

    # Deterministic parameter init (shapes dictated by the module's __init__).
    w1 = 0.1 * jax.random.normal(k_w1, (KH * KW * CIN, C_FEAT), dtype=jnp.float32)
    b1 = 0.1 * jax.random.normal(k_b1, (C_FEAT,), dtype=jnp.float32)
    w2 = 0.1 * jax.random.normal(k_w2, (C_FEAT, EMBED), dtype=jnp.float32)   # Conv2d 1x1 weight
    b2 = 0.1 * jax.random.normal(k_b2, (EMBED,), dtype=jnp.float32)          # Conv2d 1x1 bias
    params = (w1, b1, w2, b2)

    feats = encoder_cnn_forward(images, params)
    feats = jax.block_until_ready(feats)

    ref = encoder_cnn_reference(images, params)
    assert feats.shape == (B, EMBED, H * W), feats.shape
    # bf16 MXU inputs with f32 accumulation vs f32 reference.
    assert jnp.allclose(feats, ref, rtol=2e-2, atol=2e-2), "mismatch vs reference"

    print("KERNEL_OK")
</pallas_src>

<mosaic_0001>
module attributes {stable_mosaic.version = 11 : i64} {
  func.func @encoder_kernel(%arg0: i32, %arg1: memref<1x27x256xbf16, #tpu.memory_space<vmem>>, %arg2: memref<64x27xbf16, #tpu.memory_space<vmem>>, %arg3: memref<64x1xf32, #tpu.memory_space<vmem>>, %arg4: memref<32x64xbf16, #tpu.memory_space<vmem>>, %arg5: memref<32x1xf32, #tpu.memory_space<vmem>>, %arg6: memref<1x32x256xf32, #tpu.memory_space<vmem>>) attributes {dimension_semantics = [#tpu.dimension_semantics<parallel>], iteration_bounds = array<i64: 2>, scalar_prefetch = 0 : i64, scratch_operands = 0 : i64, tpu.core_type = #tpu.core_type<tc>, window_params = [{transform_indices = @transform_0, window_bounds = array<i64: 1, 27, 256>}, {pipeline_mode = #tpu.pipeline_mode<synchronous>, transform_indices = @transform_1, window_bounds = array<i64: 64, 27>}, {pipeline_mode = #tpu.pipeline_mode<synchronous>, transform_indices = @transform_2, window_bounds = array<i64: 64, 1>}, {pipeline_mode = #tpu.pipeline_mode<synchronous>, transform_indices = @transform_3, window_bounds = array<i64: 32, 64>}, {pipeline_mode = #tpu.pipeline_mode<synchronous>, transform_indices = @transform_4, window_bounds = array<i64: 32, 1>}, {transform_indices = @transform_5, window_bounds = array<i64: 1, 32, 256>}]} {
    %c0 = arith.constant 0 : index
    %c0_0 = arith.constant 0 : index
    %0 = vector.load %arg2[%c0, %c0_0] : memref<64x27xbf16, #tpu.memory_space<vmem>>, vector<64x27xbf16>
    %c0_1 = arith.constant 0 : index
    %c0_2 = arith.constant 0 : index
    %c0_3 = arith.constant 0 : index
    %1 = vector.load %arg1[%c0_1, %c0_2, %c0_3] : memref<1x27x256xbf16, #tpu.memory_space<vmem>>, vector<1x27x256xbf16>
    %2 = vector.shape_cast %1 : vector<1x27x256xbf16> to vector<27x256xbf16>
    %cst = arith.constant dense<0.000000e+00> : vector<64x256xf32>
    %3 = tpu.matmul %0, %2, %cst {dimension_numbers = #tpu.dot_dimension_numbers<[1], [0], [0], [1], [0, 0, 1, 1], [], []>} : vector<64x27xbf16>, vector<27x256xbf16>, vector<64x256xf32> -> vector<64x256xf32>
    %c0_4 = arith.constant 0 : index
    %c0_5 = arith.constant 0 : index
    %4 = vector.load %arg3[%c0_4, %c0_5] : memref<64x1xf32, #tpu.memory_space<vmem>>, vector<64x1xf32>
    %5 = vector.broadcast %4 : vector<64x1xf32> to vector<64x256xf32>
    %6 = arith.addf %3, %5 : vector<64x256xf32>
    %cst_6 = arith.constant 0.000000e+00 : f32
    %7 = vector.broadcast %cst_6 : f32 to vector<64x256xf32>
    %8 = arith.maximumf %6, %7 : vector<64x256xf32>
    %c0_7 = arith.constant 0 : index
    %c0_8 = arith.constant 0 : index
    %9 = vector.load %arg4[%c0_7, %c0_8] : memref<32x64xbf16, #tpu.memory_space<vmem>>, vector<32x64xbf16>
    %10 = arith.truncf %8 : vector<64x256xf32> to vector<64x256xbf16>
    %cst_9 = arith.constant dense<0.000000e+00> : vector<32x256xf32>
    %11 = tpu.matmul %9, %10, %cst_9 {dimension_numbers = #tpu.dot_dimension_numbers<[1], [0], [0], [1], [0, 0, 1, 1], [], []>} : vector<32x64xbf16>, vector<64x256xbf16>, vector<32x256xf32> -> vector<32x256xf32>
    %c0_10 = arith.constant 0 : index
    %c0_11 = arith.constant 0 : index
    %12 = vector.load %arg5[%c0_10, %c0_11] : memref<32x1xf32, #tpu.memory_space<vmem>>, vector<32x1xf32>
    %13 = vector.broadcast %12 : vector<32x1xf32> to vector<32x256xf32>
    %14 = arith.addf %11, %13 : vector<32x256xf32>
    %c0_12 = arith.constant 0 : index
    %c0_13 = arith.constant 0 : index
    %c0_14 = arith.constant 0 : index
    %15 = vector.load %arg6[%c0_12, %c0_13, %c0_14] : memref<1x32x256xf32, #tpu.memory_space<vmem>>, vector<1x32x256xf32>
    %16 = vector.shape_cast %15 : vector<1x32x256xf32> to vector<32x256xf32>
    %17 = vector.shape_cast %14 : vector<32x256xf32> to vector<1x32x256xf32>
    tpu.vector_store %arg6[%c0_12, %c0_13, %c0_14], %17 {strides = array<i32>} : memref<1x32x256xf32, #tpu.memory_space<vmem>>, vector<1x32x256xf32>,
    return
  }
  func.func @transform_0(%arg0: i32) -> (i32, i32, i32) {
    %c0_i32 = arith.constant 0 : i32
    %c0_i32_0 = arith.constant 0 : i32
    %c0_i32_1 = arith.constant 0 : i32
    return %arg0, %c0_i32, %c0_i32_0 : i32, i32, i32
  }
  func.func @transform_1(%arg0: i32) -> (i32, i32) {
    %c0_i32 = arith.constant 0 : i32
    %c0_i32_0 = arith.constant 0 : i32
    %c0_i32_1 = arith.constant 0 : i32
    return %c0_i32, %c0_i32_0 : i32, i32
  }
  func.func @transform_2(%arg0: i32) -> (i32, i32) {
    %c0_i32 = arith.constant 0 : i32
    %c0_i32_0 = arith.constant 0 : i32
    %c0_i32_1 = arith.constant 0 : i32
    return %c0_i32, %c0_i32_0 : i32, i32
  }
  func.func @transform_3(%arg0: i32) -> (i32, i32) {
    %c0_i32 = arith.constant 0 : i32
    %c0_i32_0 = arith.constant 0 : i32
    %c0_i32_1 = arith.constant 0 : i32
    return %c0_i32, %c0_i32_0 : i32, i32
  }
  func.func @transform_4(%arg0: i32) -> (i32, i32) {
    %c0_i32 = arith.constant 0 : i32
    %c0_i32_0 = arith.constant 0 : i32
    %c0_i32_1 = arith.constant 0 : i32
    return %c0_i32, %c0_i32_0 : i32, i32
  }
  func.func @transform_5(%arg0: i32) -> (i32, i32, i32) {
    %c0_i32 = arith.constant 0 : i32
    %c0_i32_0 = arith.constant 0 : i32
    %c0_i32_1 = arith.constant 0 : i32
    return %arg0, %c0_i32, %c0_i32_0 : i32, i32, i32
  }
}

</mosaic_0001>

<llo_original>
// kernel: tpu_custom_call.1
$region0: #{tpu_custom_call.1}
  #allocation0 [shape = 'u32[]', space=smem, size = 0x4, offset = 0x4, fixed_abs, tag = 'smem constant byte address 0x4 - core index']
  #allocation1 [shape = 'u32[144,128]{1,0:T(1,128)}', space=vmem, size = 0x12000, scoped, tag = 'internal scratch']
  %s0 = inlined_call_operand.vmem [shape: bf16[2,27,256], index: 0, kind: input, shape index: {}]
  %s1 = inlined_call_operand.vmem [shape: bf16[64,27], index: 1, kind: input, shape index: {}]
  %s2 = inlined_call_operand.vmem [shape: f32[64,1], index: 2, kind: input, shape index: {}]
  %s3 = inlined_call_operand.vmem [shape: bf16[32,64], index: 3, kind: input, shape index: {}]
  %s4 = inlined_call_operand.vmem [shape: f32[32,1], index: 4, kind: input, shape index: {}]
  %s5 = inlined_call_operand.hbm [shape: f32[2,32,256], index: 5, kind: output, shape index: {}]
  %s6 = sld [smem:[#allocation0]]
  $region53: #{tpu_custom_call.1} parent=0
    _
  %s8 = ssub.s32 1, %s6
  %s9 = scalar_select 0, %s8, %s6
  $region1: #{tpu_custom_call.1} parent=0
    #allocation2 [shape = 'u8[65536]{0}', space=vmem, size = 0x10000, scoped, tag = 'output window, operand 0']
    #allocation3 [shape = 's32[2]{0}', space=sflag, size = 0x8, scoped, tag = 'scoped memory for tpu_custom_call.1']
    %10 = vsyncpa [#allocation3], 0
    %s11 = scalar_lea.sflag [#allocation3], 1
    %12 = vsyncpa %s11, 0
    loop: start=0, step=1, limit=4
    $region2: #{tpu_custom_call.1} parent=1 // loop_pre_header
      _
    $region3: #{tpu_custom_call.1} parent=1 // loop_header
      %s14 = sphi 0, %s18
      %p15 = scmp.ge.s32.totalorder %s14, 4
      %s24 = sphi 0, %s26
      %s27 = sphi 0, %s24
      %s28 = sphi 0, %s27
      %s44 = sphi 0, %s28
      %s48 = sphi 0, %s48
      %s50 = sphi 0, %s48
      %s51 = sphi 0, %s50
      %s65 = sphi 0, %s51
      %s69 = sphi 0, %s69
      %s71 = sphi 0, %s69
      %s72 = sphi 0, %s71
      %s86 = sphi 0, %s72
      %s90 = sphi 0, %s90
      %s92 = sphi 0, %s90
      %s93 = sphi 0, %s92
      %s107 = sphi 0, %s93
      %s111 = sphi 0, %s111
      %s113 = sphi 0, %s111
      %s114 = sphi 0, %s113
      %s128 = sphi 0, %s114
      %s134 = sphi 0, %s136
      %s137 = sphi 0, %s134
      %s138 = sphi 0, %s137
      %s154 = sphi 0, %s138
    $region4: #{tpu_custom_call.1} parent=1 // loop_header_branch
      %17 = sbr.rel (%p15) target = $region8
    $region5: #{tpu_custom_call.1} parent=1 // loop_body
      %s19 = ssub.s32 %s14, 1
      %s20 = ssub.s32 %s14, 2
      %s21 = sadd.s32 %s14, 1
      %s22 = ssub.s32 %s14, %s21
      %p23 = scmp.eq.s32.totalorder %s22, 0
      %s25 = sadd.s32 %s24, 1
      %s26 = scalar_select %p23, %s24, %s25
      %p29 = pneg %p23
      %p30 = scmp.eq.s32.totalorder %s14, 1
      %p31 = por %p29, %p30
      %p32 = scmp.ne.s32.totalorder %s24, %s27
      %p33 = scmp.eq.s32.totalorder %s14, 0
      %p34 = por %p32, %p33
      %p35 = scmp.ne.s32.totalorder %s24, %s27
      %p36 = scmp.eq.s32.totalorder %s19, 1
      %p37 = por %p35, %p36
      %p38 = scmp.ne.s32.totalorder %s27, %s28
      %p39 = scmp.eq.s32.totalorder %s19, 0
      %p40 = por %p38, %p39
      %p41 = scmp.ne.s32.totalorder %s27, %s28
      %p42 = scmp.eq.s32.totalorder %s20, 1
      %p43 = por %p41, %p42
      %p45 = scmp.ne.s32.totalorder %s28, %s44
      %p46 = scmp.eq.s32.totalorder %s20, 0
      %p47 = por %p45, %p46
      %s49 = sadd.s32 %s48, 1
      %p52 = scmp.eq.s32.totalorder %s14, 1
      %p53 = scmp.ne.s32.totalorder %s48, %s50
      %p54 = scmp.eq.s32.totalorder %s14, 0
      %p55 = por %p53, %p54
      %p56 = scmp.ne.s32.totalorder %s48, %s50
      %p57 = scmp.eq.s32.totalorder %s19, 1
      %p58 = por %p56, %p57
      %p59 = scmp.ne.s32.totalorder %s50, %s51
      %p60 = scmp.eq.s32.totalorder %s19, 0
      %p61 = por %p59, %p60
      %p62 = scmp.ne.s32.totalorder %s50, %s51
      %p63 = scmp.eq.s32.totalorder %s20, 1
      %p64 = por %p62, %p63
      %p66 = scmp.ne.s32.totalorder %s51, %s65
      %p67 = scmp.eq.s32.totalorder %s20, 0
      %p68 = por %p66, %p67
      %s70 = sadd.s32 %s69, 1
      %p73 = scmp.eq.s32.totalorder %s14, 1
      %p74 = scmp.ne.s32.totalorder %s69, %s71
      %p75 = scmp.eq.s32.totalorder %s14, 0
      %p76 = por %p74, %p75
      %p77 = scmp.ne.s32.totalorder %s69, %s71
      %p78 = scmp.eq.s32.totalorder %s19, 1
      %p79 = por %p77, %p78
      %p80 = scmp.ne.s32.totalorder %s71, %s72
      %p81 = scmp.eq.s32.totalorder %s19, 0
      %p82 = por %p80, %p81
      %p83 = scmp.ne.s32.totalorder %s71, %s72
      %p84 = scmp.eq.s32.totalorder %s20, 1
      %p85 = por %p83, %p84
      %p87 = scmp.ne.s32.totalorder %s72, %s86
      %p88 = scmp.eq.s32.totalorder %s20, 0
      %p89 = por %p87, %p88
      %s91 = sadd.s32 %s90, 1
      %p94 = scmp.eq.s32.totalorder %s14, 1
      %p95 = scmp.ne.s32.totalorder %s90, %s92
      %p96 = scmp.eq.s32.totalorder %s14, 0
      %p97 = por %p95, %p96
      %p98 = scmp.ne.s32.totalorder %s90, %s92
      %p99 = scmp.eq.s32.totalorder %s19, 1
      %p100 = por %p98, %p99
      %p101 = scmp.ne.s32.totalorder %s92, %s93
      %p102 = scmp.eq.s32.totalorder %s19, 0
      %p103 = por %p101, %p102
      %p104 = scmp.ne.s32.totalorder %s92, %s93
      %p105 = scmp.eq.s32.totalorder %s20, 1
      %p106 = por %p104, %p105
      %p108 = scmp.ne.s32.totalorder %s93, %s107
      %p109 = scmp.eq.s32.totalorder %s20, 0
      %p110 = por %p108, %p109
      %s112 = sadd.s32 %s111, 1
      %p115 = scmp.eq.s32.totalorder %s14, 1
      %p116 = scmp.ne.s32.totalorder %s111, %s113
      %p117 = scmp.eq.s32.totalorder %s14, 0
      %p118 = por %p116, %p117
      %p119 = scmp.ne.s32.totalorder %s111, %s113
      %p120 = scmp.eq.s32.totalorder %s19, 1
      %p121 = por %p119, %p120
      %p122 = scmp.ne.s32.totalorder %s113, %s114
      %p123 = scmp.eq.s32.totalorder %s19, 0
      %p124 = por %p122, %p123
      %p125 = scmp.ne.s32.totalorder %s113, %s114
      %p126 = scmp.eq.s32.totalorder %s20, 1
      %p127 = por %p125, %p126
      %p129 = scmp.ne.s32.totalorder %s114, %s128
      %p130 = scmp.eq.s32.totalorder %s20, 0
      %p131 = por %p129, %p130
      %s132 = ssub.s32 %s14, %s21
      %p133 = scmp.eq.s32.totalorder %s132, 0
      %s135 = sadd.s32 %s134, 1
      %s136 = scalar_select %p133, %s134, %s135
      %p139 = pneg %p133
      %p140 = scmp.eq.s32.totalorder %s14, 1
      %p141 = por %p139, %p140
      %p142 = scmp.ne.s32.totalorder %s134, %s137
      %p143 = scmp.eq.s32.totalorder %s14, 0
      %p144 = por %p142, %p143
      %p145 = scmp.ne.s32.totalorder %s134, %s137
      %p146 = scmp.eq.s32.totalorder %s19, 1
      %p147 = por %p145, %p146
      %p148 = scmp.ne.s32.totalorder %s137, %s138
      %p149 = scmp.eq.s32.totalorder %s19, 0
      %p150 = por %p148, %p149
      %p151 = scmp.ne.s32.totalorder %s137, %s138
      %p152 = scmp.eq.s32.totalorder %s20, 1
      %p153 = por %p151, %p152
      %p155 = scmp.ne.s32.totalorder %s138, %s154
      %p156 = scmp.eq.s32.totalorder %s20, 0
      %p157 = por %p155, %p156
      %p158 = scmp.le.s32.totalorder 1, %s14
      %p159 = scmp.lt.s32.totalorder %s14, 3
      %p160 = pnand %p158, %p159
      %p161 = pneg %p160
      // Predicated region
      $region9: #{tpu_custom_call.1} parent=5 // pred_check
        _
      $region10: #{tpu_custom_call.1} parent=5 // pred_check_branch
        %163 = sbr.rel (%p160) target = $region12
      $region11: #{tpu_custom_call.1} parent=5 // pred_region
        %s164 = ssub.s32 %s14, 1
        // Predicated region
        $region13: #{tpu_custom_call.1} parent=11 // pred_check
          %p165 = pneg %p61
        $region14: #{tpu_custom_call.1} parent=11 // pred_check_branch
          %167 = sbr.rel (%p165) target = $region16
        $region15: #{tpu_custom_call.1} parent=11 // pred_region
          _
        $region16: #{tpu_custom_call.1} parent=11 // pred_fallthru
          _
        // Predicated region
        $region17: #{tpu_custom_call.1} parent=11 // pred_check
          %p168 = pneg %p82
        $region18: #{tpu_custom_call.1} parent=11 // pred_check_branch
          %170 = sbr.rel (%p168) target = $region20
        $region19: #{tpu_custom_call.1} parent=11 // pred_region
          _
        $region20: #{tpu_custom_call.1} parent=11 // pred_fallthru
          _
        // Predicated region
        $region21: #{tpu_custom_call.1} parent=11 // pred_check
          %p171 = pneg %p103
        $region22: #{tpu_custom_call.1} parent=11 // pred_check_branch
          %173 = sbr.rel (%p171) target = $region24
        $region23: #{tpu_custom_call.1} parent=11 // pred_region
          _
        $region24: #{tpu_custom_call.1} parent=11 // pred_fallthru
          _
        // Predicated region
        $region25: #{tpu_custom_call.1} parent=11 // pred_check
          %p174 = pneg %p124
        $region26: #{tpu_custom_call.1} parent=11 // pred_check_branch
          %176 = sbr.rel (%p174) target = $region28
        $region27: #{tpu_custom_call.1} parent=11 // pred_region
          _
        $region28: #{tpu_custom_call.1} parent=11 // pred_fallthru
          _
      $region12: #{tpu_custom_call.1} parent=5 // pred_fallthru
        _
      %p177 = scmp.lt.s32.totalorder %s14, 2
      // Predicated region
      $region29: #{tpu_custom_call.1} parent=5 // pred_check
        %p178 = pneg %p177
      $region30: #{tpu_custom_call.1} parent=5 // pred_check_branch
        %180 = sbr.rel (%p178) target = $region32
      $region31: #{tpu_custom_call.1} parent=5 // pred_region
        // Predicated region
        $region33: #{tpu_custom_call.1} parent=31 // pred_check
          %p181 = pneg %p34
        $region34: #{tpu_custom_call.1} parent=31 // pred_check_branch
          %183 = sbr.rel (%p181) target = $region36
        $region35: #{tpu_custom_call.1} parent=31 // pred_region
          %p184 = scmp.lt.s32.totalorder %s14, 1
          %s185 = scalar_select %p184, %s14, 1
          %s186 = smul.addr %s185, 8
          %s187 = smul.addr %s186, 4
          %s188 = scalar_lea.vmem %s0, %s187
        $region36: #{tpu_custom_call.1} parent=31 // pred_fallthru
          _
      $region32: #{tpu_custom_call.1} parent=5 // pred_fallthru
        _
      %p189 = scmp.le.s32.totalorder 1, %s14
      %p190 = scmp.lt.s32.totalorder %s14, 3
      %p191 = pnand %p189, %p190
      %p192 = pneg %p191
      // Predicated region
      $region37: #{tpu_custom_call.1} parent=5 // pred_check
        _
      $region38: #{tpu_custom_call.1} parent=5 // pred_check_branch
        %194 = sbr.rel (%p191) target = $region40
      $region39: #{tpu_custom_call.1} parent=5 // pred_region
        %s195 = ssub.s32 %s14, 1
        %p196 = scmp.lt.s32.totalorder %s19, 1
        %s197 = scalar_select %p196, %s19, 1
        %s198 = smul.addr %s197, 8
        %s199 = smul.addr %s198, 4
        %s200 = scalar_lea.vmem %s0, %s199
        %p201 = pneg %p40
        %p202 = pneg %p37
        %p203 = pneg %p61
        %p204 = pneg %p58
        %p205 = pneg %p82
        %p206 = pneg %p79
        %p207 = pneg %p103
        %p208 = pneg %p100
        %p209 = pneg %p124
        %p210 = pneg %p121
        %p211 = pneg %p150
        %p212 = pneg %p147
        %s213 = sand.u32 %s137, 1
        %s214 = scalar_lea.sflag [#allocation3], %s213
        %s215 = sand.u32 %s137, 1
        %s216 = smul.addr %s215, 64
        %s217 = scalar_lea.vmem [#allocation2], %s216
        %p218 = scmp.lt.s32.totalorder %s19, 1
        %s219 = scalar_select %p218, %s19, 1
        %s220 = smul.addr %s219, 8
        %s221 = smul.addr %s220, 4
        %s222 = scalar_lea.vmem %s0, %s221
        %v224 = vld [vmem:[%s1] sm:$0xf]
        %v225 = vld [vmem:[%s1 + $0x4] sm:$0xf]
        %v226 = vld [vmem:[%s1 + $0x8] sm:$0xf]
        %v227 = vld [vmem:[%s1 + $0xc] sm:$0xf]
        %v228 = vld [vmem:[%s1 + $0x10] sm:$0xf]
        %v229 = vld [vmem:[%s1 + $0x14] sm:$0xf]
        %v230 = vld [vmem:[%s1 + $0x18] sm:$0xf]
        %v231 = vld [vmem:[%s1 + $0x1c] sm:$0xf]
        %v232 = vld [vmem:[%s222] sm:$0xff]
        %v233 = vld [vmem:[%s222 + $0x8] sm:$0xff]
        %v234 = vld [vmem:[%s222 + $0x10] sm:$0xff]
        %v235 = vld [vmem:[%s222 + $0x18] sm:$0x33]
        %v236 = vld [vmem:[%s2] sm:$0xff]
        %v237 = vld [vmem:[%s2 + $0x8] sm:$0xff]
        %v238 = vld [vmem:[%s2 + $0x10] sm:$0xff]
        %v239 = vld [vmem:[%s2 + $0x18] sm:$0xff]
        %v240 = vld [vmem:[%s2 + $0x20] sm:$0xff]
        %v241 = vld [vmem:[%s2 + $0x28] sm:$0xff]
        %v242 = vld [vmem:[%s2 + $0x30] sm:$0xff]
        %v243 = vld [vmem:[%s2 + $0x38] sm:$0xff]
        %245 = vset.pattern.permute.xlu0 0
        %246 = vperm.xlu0 %245, %v236
        %v247 = vpop.permute.xlu0 %246
        %250 = vset.pattern.permute.xlu0 0
        %251 = vperm.xlu0 %250, %v237
        %v252 = vpop.permute.xlu0 %251
        %255 = vset.pattern.permute.xlu0 0
        %256 = vperm.xlu0 %255, %v238
        %v257 = vpop.permute.xlu0 %256
        %260 = vset.pattern.permute.xlu0 0
        %261 = vperm.xlu0 %260, %v239
        %v262 = vpop.permute.xlu0 %261
        %265 = vset.pattern.permute.xlu0 0
        %266 = vperm.xlu0 %265, %v240
        %v267 = vpop.permute.xlu0 %266
        %270 = vset.pattern.permute.xlu0 0
        %271 = vperm.xlu0 %270, %v241
        %v272 = vpop.permute.xlu0 %271
        %275 = vset.pattern.permute.xlu0 0
        %276 = vperm.xlu0 %275, %v242
        %v277 = vpop.permute.xlu0 %276
        %280 = vset.pattern.permute.xlu0 0
        %281 = vperm.xlu0 %280, %v243
        %v282 = vpop.permute.xlu0 %281
        %v292 = vunpack.c.l.b16 %v224
        %v293 = vunpack.c.l.b16 %v225
        %v294 = vunpack.c.l.b16 %v226
        %v295 = vunpack.c.l.b16 %v227
        %v296 = vunpack.c.l.b16 %v228
        %v297 = vunpack.c.l.b16 %v229
        %v298 = vunpack.c.l.b16 %v230
        %v299 = vunpack.c.l.b16 %v231
        %v300 = vpack.c.b16 %v293, %v292
        %v301 = vpack.c.b16 %v295, %v294
        %v302 = vpack.c.b16 %v297, %v296
        %v303 = vpack.c.b16 %v299, %v298
        %v308 = vunpack.c.l.b16 %v232
        %v309 = vunpack.c.h.b16 %v232
        %v310 = vunpack.c.l.b16 %v233
        %v311 = vunpack.c.h.b16 %v233
        %v312 = vunpack.c.l.b16 %v234
        %v313 = vunpack.c.h.b16 %v234
        %v314 = vunpack.c.l.b16 %v235
        %v315 = vunpack.c.h.b16 %v235
        %v316 = vpack.c.b16 %v310, %v308
        %v317 = vpack.c.b16 %v311, %v309
        %v318 = vpack.c.b16 %v314, %v312
        %v319 = vpack.c.b16 %v315, %v313
        %vm322 = vcmask 220160
        %v324 = vsel %vm322, %v300, 0
        %v327 = vsel %vm322, %v301, 0
        %v330 = vsel %vm322, %v302, 0
        %v333 = vsel %vm322, %v303, 0
        %vm335 = vcmask 1044480
        %vm336 = vcmask 1045504
        %v337 = vsel %vm335, 4294967295, 65535
        %v338 = vsel %vm336, %v337, 0
        %v340 = vand.u32 %v318, %v338
        %v343 = vand.u32 %v319, %v338
        %345 = vmatprep.subr.bf16.mxu0 0
        %346 = vmatpush1.bf16.msra.mxu0 0
        %347 = vmatprep.subr.bf16.mxu0 0
        %348 = vmatpush1.bf16.msra.mxu0 0
        %349 = vmatprep.subr.bf16.mxu0 0
        %350 = vmatpush1.bf16.msra.mxu0 0
        %351 = vmatprep.subr.bf16.mxu0 0
        %352 = vmatpush1.bf16.msra.mxu0 0
        %353 = vmatprep.subr.bf16.mxu0 0
        %354 = vmatpush1.bf16.msra.mxu0 0
        %355 = vmatprep.subr.bf16.mxu0 0
        %356 = vmatpush1.bf16.msra.mxu0 0
        %357 = vmatprep.subr.bf16.mxu0 %v343
        %358 = vmatpush1.bf16.msra.mxu0 %v340
        %359 = vmatprep.subr.bf16.mxu0 %v317
        %360 = vmatpush1.bf16.msra.mxu0 %v316
        %361 = vmatprep.subr.bf16.mxu0 0
        %362 = vmatpush2.bf16.msra.mxu0 0
        %363 = vmatprep.subr.bf16.mxu0 0
        %364 = vmatpush2.bf16.msra.mxu0 0
        %365 = vmatprep.subr.bf16.mxu0 0
        %366 = vmatpush2.bf16.msra.mxu0 0
        %367 = vmatprep.subr.bf16.mxu0 0
        %368 = vmatpush2.bf16.msra.mxu0 0
        %369 = vmatprep.subr.bf16.mxu0 0
        %370 = vmatpush2.bf16.msra.mxu0 0
        %371 = vmatprep.subr.bf16.mxu0 0
        %372 = vmatpush2.bf16.msra.mxu0 0
        %373 = vmatprep.subr.bf16.mxu0 0
        %374 = vmatpush2.bf16.msra.mxu0 0
        %375 = vmatprep.subr.bf16.mxu0 0
        %376 = vmatpush2.bf16.msra.mxu0 0
        %377 = vmatprep.mubr.bf16.mxu0 0
        %378 = vmatmul.mubr.bf16.gmra.mxu0 %v324
        %v379 = vpop.f32.mrf.mxu0
        %v380 = vadd.f32 %v247, %v379
        %v381 = vpop.f32.mrf.mxu0
        %v382 = vadd.f32 %v247, %v381
        %v383 = vpop.f32.mrf.mxu0
        %v384 = vadd.f32 %v252, %v383
        %v385 = vpop.f32.mrf.mxu0
        %v386 = vadd.f32 %v252, %v385
        %387 = vmatprep.mubr.bf16.mxu0 0
        %388 = vmatmul.mubr.bf16.gmra.mxu0 %v327
        %v389 = vpop.f32.mrf.mxu0
        %v390 = vadd.f32 %v257, %v389
        %v391 = vpop.f32.mrf.mxu0
        %v392 = vadd.f32 %v257, %v391
        %v393 = vpop.f32.mrf.mxu0
        %v394 = vadd.f32 %v262, %v393
        %v395 = vpop.f32.mrf.mxu0
        %v396 = vadd.f32 %v262, %v395
        %397 = vmatprep.mubr.bf16.mxu0 0
        %398 = vmatmul.mubr.bf16.gmra.mxu0 %v330
        %v399 = vpop.f32.mrf.mxu0
        %v400 = vadd.f32 %v267, %v399
        %v401 = vpop.f32.mrf.mxu0
        %v402 = vadd.f32 %v267, %v401
        %v403 = vpop.f32.mrf.mxu0
        %v404 = vadd.f32 %v272, %v403
        %v405 = vpop.f32.mrf.mxu0
        %v406 = vadd.f32 %v272, %v405
        %407 = vmatprep.mubr.bf16.mxu0 0
        %408 = vmatmul.mubr.bf16.gmra.mxu0 %v333
        %v409 = vpop.f32.mrf.mxu0
        %v410 = vadd.f32 %v277, %v409
        %v411 = vpop.f32.mrf.mxu0
        %v412 = vadd.f32 %v277, %v411
        %v413 = vpop.f32.mrf.mxu0
        %v414 = vadd.f32 %v282, %v413
        %v415 = vpop.f32.mrf.mxu0
        %v416 = vadd.f32 %v282, %v415
        %417 = vdwg.mxu0
        %v418 = vmax.f32 %v380, 0.0
        %v419 = vmax.f32 %v382, 0.0
        %v420 = vmax.f32 %v384, 0.0
        %v421 = vmax.f32 %v386, 0.0
        %v422 = vmax.f32 %v390, 0.0
        %v423 = vmax.f32 %v392, 0.0
        %v424 = vmax.f32 %v394, 0.0
        %v425 = vmax.f32 %v396, 0.0
        %v426 = vmax.f32 %v400, 0.0
        %v427 = vmax.f32 %v402, 0.0
        %v428 = vmax.f32 %v404, 0.0
        %v429 = vmax.f32 %v406, 0.0
        %v430 = vmax.f32 %v410, 0.0
        %v431 = vmax.f32 %v412, 0.0
        %v432 = vmax.f32 %v414, 0.0
        %v433 = vmax.f32 %v416, 0.0
        %v434 = vld [vmem:[%s3] sm:$0xf]
        %v435 = vld [vmem:[%s3 + $0x4] sm:$0xf]
        %v436 = vld [vmem:[%s3 + $0x8] sm:$0xf]
        %v437 = vld [vmem:[%s3 + $0xc] sm:$0xf]
        %v438 = vpack.c.bf16 %v420, %v418
        %v439 = vpack.c.bf16 %v421, %v419
        %v440 = vpack.c.bf16 %v424, %v422
        %v441 = vpack.c.bf16 %v425, %v423
        %v442 = vpack.c.bf16 %v428, %v426
        %v443 = vpack.c.bf16 %v429, %v427
        %v444 = vpack.c.bf16 %v432, %v430
        %v445 = vpack.c.bf16 %v433, %v431
        %v446 = vld [vmem:[%s4] sm:$0xff]
        %v447 = vld [vmem:[%s4 + $0x8] sm:$0xff]
        %v448 = vld [vmem:[%s4 + $0x10] sm:$0xff]
        %v449 = vld [vmem:[%s4 + $0x18] sm:$0xff]
        %451 = vset.pattern.permute.xlu0 0
        %452 = vperm.xlu0 %451, %v446
        %v453 = vpop.permute.xlu0 %452
        %456 = vset.pattern.permute.xlu0 0
        %457 = vperm.xlu0 %456, %v447
        %v458 = vpop.permute.xlu0 %457
        %461 = vset.pattern.permute.xlu0 0
        %462 = vperm.xlu0 %461, %v448
        %v463 = vpop.permute.xlu0 %462
        %466 = vset.pattern.permute.xlu0 0
        %467 = vperm.xlu0 %466, %v449
        %v468 = vpop.permute.xlu0 %467
        %v474 = vunpack.c.l.b16 %v434
        %v475 = vunpack.c.l.b16 %v435
        %v476 = vunpack.c.l.b16 %v436
        %v477 = vunpack.c.l.b16 %v437
        %v478 = vpack.c.b16 %v475, %v474
        %v479 = vpack.c.b16 %v477, %v476
        %vm480 = vcmask 523264
        %v482 = vsel %vm480, %v478, 0
        %v485 = vsel %vm480, %v479, 0
        %487 = vmatprep.subr.bf16.mxu0 0
        %488 = vmatpush1.bf16.msra.mxu0 0
        %489 = vmatprep.subr.bf16.mxu0 0
        %490 = vmatpush1.bf16.msra.mxu0 0
        %491 = vmatprep.subr.bf16.mxu0 0
        %492 = vmatpush1.bf16.msra.mxu0 0
        %493 = vmatprep.subr.bf16.mxu0 0
        %494 = vmatpush1.bf16.msra.mxu0 0
        %495 = vmatprep.subr.bf16.mxu0 %v445
        %496 = vmatpush1.bf16.msra.mxu0 %v444
        %497 = vmatprep.subr.bf16.mxu0 %v443
        %498 = vmatpush1.bf16.msra.mxu0 %v442
        %499 = vmatprep.subr.bf16.mxu0 %v441
        %500 = vmatpush1.bf16.msra.mxu0 %v440
        %501 = vmatprep.subr.bf16.mxu0 %v439
        %502 = vmatpush1.bf16.msra.mxu0 %v438
        %503 = vmatprep.subr.bf16.mxu0 0
        %504 = vmatpush2.bf16.msra.mxu0 0
        %505 = vmatprep.subr.bf16.mxu0 0
        %506 = vmatpush2.bf16.msra.mxu0 0
        %507 = vmatprep.subr.bf16.mxu0 0
        %508 = vmatpush2.bf16.msra.mxu0 0
        %509 = vmatprep.subr.bf16.mxu0 0
        %510 = vmatpush2.bf16.msra.mxu0 0
        %511 = vmatprep.subr.bf16.mxu0 0
        %512 = vmatpush2.bf16.msra.mxu0 0
        %513 = vmatprep.subr.bf16.mxu0 0
        %514 = vmatpush2.bf16.msra.mxu0 0
        %515 = vmatprep.subr.bf16.mxu0 0
        %516 = vmatpush2.bf16.msra.mxu0 0
        %517 = vmatprep.subr.bf16.mxu0 0
        %518 = vmatpush2.bf16.msra.mxu0 0
        %519 = vmatprep.mubr.bf16.mxu0 0
        %520 = vmatmul.mubr.bf16.gmra.mxu0 %v482
        %v521 = vpop.f32.mrf.mxu0
        %v522 = vadd.f32 %v453, %v521
        %v523 = vpop.f32.mrf.mxu0
        %v524 = vadd.f32 %v453, %v523
        %v525 = vpop.f32.mrf.mxu0
        %v526 = vadd.f32 %v458, %v525
        %v527 = vpop.f32.mrf.mxu0
        %v528 = vadd.f32 %v458, %v527
        %529 = vmatprep.mubr.bf16.mxu0 0
        %530 = vmatmul.mubr.bf16.gmra.mxu0 %v485
        %v531 = vpop.f32.mrf.mxu0
        %v532 = vadd.f32 %v463, %v531
        %v533 = vpop.f32.mrf.mxu0
        %v534 = vadd.f32 %v463, %v533
        %v535 = vpop.f32.mrf.mxu0
        %v536 = vadd.f32 %v468, %v535
        %v537 = vpop.f32.mrf.mxu0
        %v538 = vadd.f32 %v468, %v537
        %539 = vdwg.mxu0
        %540 = vst [vmem:[%s217] sm:$0xff] %v522
        %541 = vst [vmem:[%s217 + $0x8] sm:$0xff] %v524
        %542 = vst [vmem:[%s217 + $0x10] sm:$0xff] %v526
        %543 = vst [vmem:[%s217 + $0x18] sm:$0xff] %v528
        %544 = vst [vmem:[%s217 + $0x20] sm:$0xff] %v532
        %545 = vst [vmem:[%s217 + $0x28] sm:$0xff] %v534
        %546 = vst [vmem:[%s217 + $0x30] sm:$0xff] %v536
        %547 = vst [vmem:[%s217 + $0x38] sm:$0xff] %v538
        %s548 = sand.u32 %s137, 1
        %s549 = scalar_lea.sflag [#allocation3], %s548
        %s550 = sand.u32 %s137, 1
        %s551 = smul.addr %s550, 64
        %s552 = scalar_lea.vmem [#allocation2], %s551
        // Predicated region
        $region41: #{tpu_custom_call.1} parent=39 // pred_check
          %p553 = pneg %p147
        $region42: #{tpu_custom_call.1} parent=39 // pred_check_branch
          %555 = sbr.rel (%p553) target = $region44
        $region43: #{tpu_custom_call.1} parent=39 // pred_region
          %s557 = ssub.s32 1024, 1024
          %558 = vsyncadd %s549, %s557
          %s559 = smul.addr %s19, 8
          %s560 = smul.addr %s559, 128
          %s561 = scalar_lea.hbm %s5, %s560
          %s562 = sshll.u32 %s552, 4
          %s563 = int_to_ptr.vmem [resolvable:$true] %s562
          %568 = dma.vmem_to_hbm [thread:$0]  %s563, 1024, %s561, %s549, 256, 256, 16
        $region44: #{tpu_custom_call.1} parent=39 // pred_fallthru
          _
      $region40: #{tpu_custom_call.1} parent=5 // pred_fallthru
        _
      %p569 = scmp.le.s32.totalorder 2, %s14
      // Predicated region
      $region45: #{tpu_custom_call.1} parent=5 // pred_check
        %p570 = pneg %p569
      $region46: #{tpu_custom_call.1} parent=5 // pred_check_branch
        %572 = sbr.rel (%p570) target = $region48
      $region47: #{tpu_custom_call.1} parent=5 // pred_region
        %s573 = ssub.s32 %s14, 2
        // Predicated region
        $region49: #{tpu_custom_call.1} parent=47 // pred_check
          %p574 = pneg %p153
        $region50: #{tpu_custom_call.1} parent=47 // pred_check_branch
          %576 = sbr.rel (%p574) target = $region52
        $region51: #{tpu_custom_call.1} parent=47 // pred_region
          %s577 = sand.u32 %s138, 1
          %s578 = scalar_lea.sflag [#allocation3], %s577
          %s579 = sand.u32 %s138, 1
          %s580 = smul.addr %s579, 64
          %s581 = scalar_lea.vmem [#allocation2], %s580
          %582 = dma.done %s578, 1024
        $region52: #{tpu_custom_call.1} parent=47 // pred_fallthru
          _
      $region48: #{tpu_custom_call.1} parent=5 // pred_fallthru
        _
    $region6: #{tpu_custom_call.1} parent=1 // loop_footer
      %s18 = sadd.s32 1, %s14
    $region7: #{tpu_custom_call.1} parent=1 // loop_footer_branch
      %13 = sbr.rel target = $region3
    $region8: #{tpu_custom_call.1} parent=1 // loop_exit
      _
    %583 = vsyncpa [#allocation3], 1
    %s584 = scalar_lea.sflag [#allocation3], 1
    %585 = vsyncpa %s584, 1

</llo_original>
